<compile_context>
chip_gen: v6e
topology: v6e:2x2x1
jax: 0.10.0
libtpu: 0.0.40
codegen_flags: <defaults>
</compile_context>

<pallas_src>
import functools

import jax
import jax.numpy as jnp
from jax.experimental import pallas as pl
from jax.experimental.pallas import tpu as pltpu

LANE = 128   # lane (last-dim) granularity
SUB = 8      # sublane (second-to-last dim) granularity for f32


def _round_up(x, m):
    return (x + m - 1) // m * m


def _pad2d(a, rows, cols):
    return jnp.pad(a, ((0, rows - a.shape[0]), (0, cols - a.shape[1])))


def _fused_mlp_kernel(*refs, num_layers):
    """Fused MLP forward for one batch tile.

    refs layout:
      coords_ref, time_ref,
      w0_ref, b0_ref,                                   # layer 0
      (wh_ref, wt_ref, b_ref) for each layer 1..L-1,    # split weights
      out_ref
    All feature dims are already padded to multiples of 128 (zero padding), so
    the extra lanes stay exactly zero through matmul/bias/ReLU.
    """
    coords_ref, time_ref = refs[0], refs[1]
    o_ref = refs[-1]
    p_refs = refs[2:-1]

    x = coords_ref[...]
    t = time_ref[...]

    # Layer 0: plain Linear on coords.
    w0 = p_refs[0][...]
    b0 = p_refs[1][...]
    h = jnp.dot(x, w0, preferred_element_type=jnp.float32) + b0
    if num_layers > 1:
        h = jnp.maximum(h, 0.0)

    # Layers 1..L-1: concat(h, time) @ W  ==  h @ W_h + time @ W_t.
    p = 2
    for layer in range(1, num_layers):
        wh = p_refs[p][...]
        wt = p_refs[p + 1][...]
        b = p_refs[p + 2][...]
        p += 3
        h = (jnp.dot(h, wh, preferred_element_type=jnp.float32)
             + jnp.dot(t, wt, preferred_element_type=jnp.float32)
             + b)
        if layer < num_layers - 1:   # final Linear has no activation
            h = jnp.maximum(h, 0.0)

    o_ref[...] = h.astype(o_ref.dtype)


def relu_mlp_forward(params, coords, time, *, tile_b=512):
    """Fused forward. params[0] = (w0, b0); params[i>0] = (w_h, w_t, b).

    Weights are stored as (in_features, out_features) (i.e. PyTorch W.T).
    """
    batch, in_dim = coords.shape
    t_dim = time.shape[1]
    num_layers = len(params)
    out_dim = params[-1][0].shape[1]

    # Padded (lane-dense) dims.
    in_pad = _round_up(in_dim, LANE)
    t_pad = _round_up(t_dim, LANE)

    tile_b = min(tile_b, _round_up(batch, SUB))
    b_pad = _round_up(batch, tile_b)

    coords_p = _pad2d(coords, b_pad, in_pad)
    time_p = _pad2d(time, b_pad, t_pad)

    flat_params = []
    in_specs = [
        pl.BlockSpec((tile_b, in_pad), lambda i: (i, 0)),   # coords: tiled over batch
        pl.BlockSpec((tile_b, t_pad), lambda i: (i, 0)),    # time:   tiled over batch
    ]

    # Layer 0 params (padded), VMEM-resident across all grid steps.
    w0, b0 = params[0]
    prev_pad = _round_up(w0.shape[1], LANE)
    flat_params.append(_pad2d(w0, in_pad, prev_pad))
    flat_params.append(_pad2d(b0, 1, prev_pad))
    in_specs.append(pl.BlockSpec((in_pad, prev_pad), lambda i: (0, 0)))
    in_specs.append(pl.BlockSpec((1, prev_pad), lambda i: (0, 0)))

    # Layers 1..L-1: split weights (hidden part + time part) + bias.
    for (wh, wt, b) in params[1:]:
        o_pad = _round_up(wh.shape[1], LANE)
        flat_params.append(_pad2d(wh, prev_pad, o_pad))
        flat_params.append(_pad2d(wt, t_pad, o_pad))
        flat_params.append(_pad2d(b, 1, o_pad))
        in_specs.append(pl.BlockSpec((prev_pad, o_pad), lambda i: (0, 0)))
        in_specs.append(pl.BlockSpec((t_pad, o_pad), lambda i: (0, 0)))
        in_specs.append(pl.BlockSpec((1, o_pad), lambda i: (0, 0)))
        prev_pad = o_pad

    out_pad = prev_pad
    grid = (b_pad // tile_b,)

    out = pl.pallas_call(
        functools.partial(_fused_mlp_kernel, num_layers=num_layers),
        out_shape=jax.ShapeDtypeStruct((b_pad, out_pad), coords.dtype),
        grid_spec=pltpu.PrefetchScalarGridSpec(
            num_scalar_prefetch=0,
            grid=grid,
            in_specs=in_specs,
            out_specs=pl.BlockSpec((tile_b, out_pad), lambda i: (i, 0)),
        ),
        compiler_params=pltpu.CompilerParams(
            dimension_semantics=("parallel",),   # batch-parallel (v7x megacore)
        ),
    )(coords_p, time_p, *flat_params)

    # Strip the lane/batch padding outside the kernel.
    return out[:batch, :out_dim]


def init_params(layers, time_features, key):
    """PyTorch-style (uniform +-1/sqrt(fan_in)) Linear params, split layout.

    params[0]   = (w0, b0)          w0: (layers[0], layers[1])
    params[i>0] = (w_h, w_t, b)     w_h: (layers[i], layers[i+1]),
                                    w_t: (time_features, layers[i+1])
    """
    params = []
    num_layers = len(layers) - 1
    for i in range(num_layers):
        in_dim = layers[i] if i == 0 else layers[i] + time_features
        out_dim = layers[i + 1]
        key, kw, kb = jax.random.split(key, 3)
        bound = 1.0 / float(in_dim) ** 0.5
        # stored as (in, out) == W.T relative to PyTorch's (out, in)
        w = jax.random.uniform(kw, (in_dim, out_dim), jnp.float32, -bound, bound)
        b = jax.random.uniform(kb, (1, out_dim), jnp.float32, -bound, bound)
        if i == 0:
            params.append((w, b))
        else:
            params.append((w[:layers[i], :], w[layers[i]:, :], b))
    return params


if __name__ == "__main__":
    layers = [16, 32, 32, 8]   # in -> h1 -> h2 -> out
    time_features = 4
    batch = 8

    key = jax.random.PRNGKey(0)
    key, kc, kt = jax.random.split(key, 3)
    coords = jax.random.normal(kc, (batch, layers[0]), jnp.float32)
    time = jax.random.normal(kt, (batch, time_features), jnp.float32)

    params = init_params(layers, time_features, key)

    out = relu_mlp_forward(params, coords, time)
    out = jax.block_until_ready(out)

    # Pure-JAX reference mirroring the PyTorch forward (concat formulation).
    w0, b0 = params[0]
    ref = jnp.maximum(coords @ w0 + b0, 0.0)
    ref = jnp.concatenate([ref, time], axis=-1)
    for (wh, wt, b) in params[1:-1]:
        w_full = jnp.concatenate([wh, wt], axis=0)
        ref = jnp.maximum(ref @ w_full + b, 0.0)
        ref = jnp.concatenate([ref, time], axis=-1)
    wh, wt, b = params[-1]
    ref = ref @ jnp.concatenate([wh, wt], axis=0) + b

    assert out.shape == (batch, layers[-1])
    assert jnp.allclose(out, ref, atol=1e-5, rtol=1e-5)

    print("KERNEL_OK")
</pallas_src>

<mosaic_0001>
module attributes {stable_mosaic.version = 11 : i64} {
  func.func @_fused_mlp_kernel(%arg0: i32, %arg1: memref<8x128xf32, #tpu.memory_space<vmem>>, %arg2: memref<8x128xf32, #tpu.memory_space<vmem>>, %arg3: memref<128x128xf32, #tpu.memory_space<vmem>>, %arg4: memref<1x128xf32, #tpu.memory_space<vmem>>, %arg5: memref<128x128xf32, #tpu.memory_space<vmem>>, %arg6: memref<128x128xf32, #tpu.memory_space<vmem>>, %arg7: memref<1x128xf32, #tpu.memory_space<vmem>>, %arg8: memref<128x128xf32, #tpu.memory_space<vmem>>, %arg9: memref<128x128xf32, #tpu.memory_space<vmem>>, %arg10: memref<1x128xf32, #tpu.memory_space<vmem>>, %arg11: memref<8x128xf32, #tpu.memory_space<vmem>>) attributes {dimension_semantics = [#tpu.dimension_semantics<parallel>], iteration_bounds = array<i64: 1>, scalar_prefetch = 0 : i64, scratch_operands = 0 : i64, tpu.core_type = #tpu.core_type<tc>, window_params = [{transform_indices = @transform_0, window_bounds = array<i64: 8, 128>}, {transform_indices = @transform_1, window_bounds = array<i64: 8, 128>}, {pipeline_mode = #tpu.pipeline_mode<synchronous>, transform_indices = @transform_2, window_bounds = array<i64: 128, 128>}, {pipeline_mode = #tpu.pipeline_mode<synchronous>, transform_indices = @transform_3, window_bounds = array<i64: 1, 128>}, {pipeline_mode = #tpu.pipeline_mode<synchronous>, transform_indices = @transform_4, window_bounds = array<i64: 128, 128>}, {pipeline_mode = #tpu.pipeline_mode<synchronous>, transform_indices = @transform_5, window_bounds = array<i64: 128, 128>}, {pipeline_mode = #tpu.pipeline_mode<synchronous>, transform_indices = @transform_6, window_bounds = array<i64: 1, 128>}, {pipeline_mode = #tpu.pipeline_mode<synchronous>, transform_indices = @transform_7, window_bounds = array<i64: 128, 128>}, {pipeline_mode = #tpu.pipeline_mode<synchronous>, transform_indices = @transform_8, window_bounds = array<i64: 128, 128>}, {pipeline_mode = #tpu.pipeline_mode<synchronous>, transform_indices = @transform_9, window_bounds = array<i64: 1, 128>}, {transform_indices = @transform_10, window_bounds = array<i64: 8, 128>}]} {
    %c0 = arith.constant 0 : index
    %c0_0 = arith.constant 0 : index
    %0 = vector.load %arg1[%c0, %c0_0] : memref<8x128xf32, #tpu.memory_space<vmem>>, vector<8x128xf32>
    %c0_1 = arith.constant 0 : index
    %c0_2 = arith.constant 0 : index
    %1 = vector.load %arg2[%c0_1, %c0_2] : memref<8x128xf32, #tpu.memory_space<vmem>>, vector<8x128xf32>
    %c0_3 = arith.constant 0 : index
    %c0_4 = arith.constant 0 : index
    %2 = vector.load %arg3[%c0_3, %c0_4] : memref<128x128xf32, #tpu.memory_space<vmem>>, vector<128x128xf32>
    %c0_5 = arith.constant 0 : index
    %c0_6 = arith.constant 0 : index
    %3 = vector.load %arg4[%c0_5, %c0_6] : memref<1x128xf32, #tpu.memory_space<vmem>>, vector<1x128xf32>
    %cst = arith.constant dense<0.000000e+00> : vector<8x128xf32>
    %4 = tpu.matmul %0, %2, %cst {dimension_numbers = #tpu.dot_dimension_numbers<[1], [0], [0], [1], [0, 0, 1, 1], [], []>} : vector<8x128xf32>, vector<128x128xf32>, vector<8x128xf32> -> vector<8x128xf32>
    %5 = vector.broadcast %3 : vector<1x128xf32> to vector<8x128xf32>
    %6 = arith.addf %4, %5 : vector<8x128xf32>
    %cst_7 = arith.constant 0.000000e+00 : f32
    %7 = vector.broadcast %cst_7 : f32 to vector<8x128xf32>
    %8 = arith.maximumf %6, %7 : vector<8x128xf32>
    %c0_8 = arith.constant 0 : index
    %c0_9 = arith.constant 0 : index
    %9 = vector.load %arg5[%c0_8, %c0_9] : memref<128x128xf32, #tpu.memory_space<vmem>>, vector<128x128xf32>
    %c0_10 = arith.constant 0 : index
    %c0_11 = arith.constant 0 : index
    %10 = vector.load %arg6[%c0_10, %c0_11] : memref<128x128xf32, #tpu.memory_space<vmem>>, vector<128x128xf32>
    %c0_12 = arith.constant 0 : index
    %c0_13 = arith.constant 0 : index
    %11 = vector.load %arg7[%c0_12, %c0_13] : memref<1x128xf32, #tpu.memory_space<vmem>>, vector<1x128xf32>
    %cst_14 = arith.constant dense<0.000000e+00> : vector<8x128xf32>
    %12 = tpu.matmul %8, %9, %cst_14 {dimension_numbers = #tpu.dot_dimension_numbers<[1], [0], [0], [1], [0, 0, 1, 1], [], []>} : vector<8x128xf32>, vector<128x128xf32>, vector<8x128xf32> -> vector<8x128xf32>
    %cst_15 = arith.constant dense<0.000000e+00> : vector<8x128xf32>
    %13 = tpu.matmul %1, %10, %cst_15 {dimension_numbers = #tpu.dot_dimension_numbers<[1], [0], [0], [1], [0, 0, 1, 1], [], []>} : vector<8x128xf32>, vector<128x128xf32>, vector<8x128xf32> -> vector<8x128xf32>
    %14 = arith.addf %12, %13 : vector<8x128xf32>
    %15 = vector.broadcast %11 : vector<1x128xf32> to vector<8x128xf32>
    %16 = arith.addf %14, %15 : vector<8x128xf32>
    %cst_16 = arith.constant 0.000000e+00 : f32
    %17 = vector.broadcast %cst_16 : f32 to vector<8x128xf32>
    %18 = arith.maximumf %16, %17 : vector<8x128xf32>
    %c0_17 = arith.constant 0 : index
    %c0_18 = arith.constant 0 : index
    %19 = vector.load %arg8[%c0_17, %c0_18] : memref<128x128xf32, #tpu.memory_space<vmem>>, vector<128x128xf32>
    %c0_19 = arith.constant 0 : index
    %c0_20 = arith.constant 0 : index
    %20 = vector.load %arg9[%c0_19, %c0_20] : memref<128x128xf32, #tpu.memory_space<vmem>>, vector<128x128xf32>
    %c0_21 = arith.constant 0 : index
    %c0_22 = arith.constant 0 : index
    %21 = vector.load %arg10[%c0_21, %c0_22] : memref<1x128xf32, #tpu.memory_space<vmem>>, vector<1x128xf32>
    %cst_23 = arith.constant dense<0.000000e+00> : vector<8x128xf32>
    %22 = tpu.matmul %18, %19, %cst_23 {dimension_numbers = #tpu.dot_dimension_numbers<[1], [0], [0], [1], [0, 0, 1, 1], [], []>} : vector<8x128xf32>, vector<128x128xf32>, vector<8x128xf32> -> vector<8x128xf32>
    %cst_24 = arith.constant dense<0.000000e+00> : vector<8x128xf32>
    %23 = tpu.matmul %1, %20, %cst_24 {dimension_numbers = #tpu.dot_dimension_numbers<[1], [0], [0], [1], [0, 0, 1, 1], [], []>} : vector<8x128xf32>, vector<128x128xf32>, vector<8x128xf32> -> vector<8x128xf32>
    %24 = arith.addf %22, %23 : vector<8x128xf32>
    %25 = vector.broadcast %21 : vector<1x128xf32> to vector<8x128xf32>
    %26 = arith.addf %24, %25 : vector<8x128xf32>
    %c0_25 = arith.constant 0 : index
    %c0_26 = arith.constant 0 : index
    %27 = vector.load %arg11[%c0_25, %c0_26] : memref<8x128xf32, #tpu.memory_space<vmem>>, vector<8x128xf32>
    tpu.vector_store %arg11[%c0_25, %c0_26], %26 {strides = array<i32>} : memref<8x128xf32, #tpu.memory_space<vmem>>, vector<8x128xf32>,
    return
  }
  func.func @transform_0(%arg0: i32) -> (i32, i32) {
    %c0_i32 = arith.constant 0 : i32
    %c0_i32_0 = arith.constant 0 : i32
    return %arg0, %c0_i32 : i32, i32
  }
  func.func @transform_1(%arg0: i32) -> (i32, i32) {
    %c0_i32 = arith.constant 0 : i32
    %c0_i32_0 = arith.constant 0 : i32
    return %arg0, %c0_i32 : i32, i32
  }
  func.func @transform_2(%arg0: i32) -> (i32, i32) {
    %c0_i32 = arith.constant 0 : i32
    %c0_i32_0 = arith.constant 0 : i32
    %c0_i32_1 = arith.constant 0 : i32
    return %c0_i32, %c0_i32_0 : i32, i32
  }
  func.func @transform_3(%arg0: i32) -> (i32, i32) {
    %c0_i32 = arith.constant 0 : i32
    %c0_i32_0 = arith.constant 0 : i32
    %c0_i32_1 = arith.constant 0 : i32
    return %c0_i32, %c0_i32_0 : i32, i32
  }
  func.func @transform_4(%arg0: i32) -> (i32, i32) {
    %c0_i32 = arith.constant 0 : i32
    %c0_i32_0 = arith.constant 0 : i32
    %c0_i32_1 = arith.constant 0 : i32
    return %c0_i32, %c0_i32_0 : i32, i32
  }
  func.func @transform_5(%arg0: i32) -> (i32, i32) {
    %c0_i32 = arith.constant 0 : i32
    %c0_i32_0 = arith.constant 0 : i32
    %c0_i32_1 = arith.constant 0 : i32
    return %c0_i32, %c0_i32_0 : i32, i32
  }
  func.func @transform_6(%arg0: i32) -> (i32, i32) {
    %c0_i32 = arith.constant 0 : i32
    %c0_i32_0 = arith.constant 0 : i32
    %c0_i32_1 = arith.constant 0 : i32
    return %c0_i32, %c0_i32_0 : i32, i32
  }
  func.func @transform_7(%arg0: i32) -> (i32, i32) {
    %c0_i32 = arith.constant 0 : i32
    %c0_i32_0 = arith.constant 0 : i32
    %c0_i32_1 = arith.constant 0 : i32
    return %c0_i32, %c0_i32_0 : i32, i32
  }
  func.func @transform_8(%arg0: i32) -> (i32, i32) {
    %c0_i32 = arith.constant 0 : i32
    %c0_i32_0 = arith.constant 0 : i32
    %c0_i32_1 = arith.constant 0 : i32
    return %c0_i32, %c0_i32_0 : i32, i32
  }
  func.func @transform_9(%arg0: i32) -> (i32, i32) {
    %c0_i32 = arith.constant 0 : i32
    %c0_i32_0 = arith.constant 0 : i32
    %c0_i32_1 = arith.constant 0 : i32
    return %c0_i32, %c0_i32_0 : i32, i32
  }
  func.func @transform_10(%arg0: i32) -> (i32, i32) {
    %c0_i32 = arith.constant 0 : i32
    %c0_i32_0 = arith.constant 0 : i32
    return %arg0, %c0_i32 : i32, i32
  }
}

</mosaic_0001>

<llo_original>
// kernel: tpu_custom_call.1
$region0: #{tpu_custom_call.1}
  #allocation0 [shape = 'u32[]', space=smem, size = 0x4, offset = 0x4, fixed_abs, tag = 'smem constant byte address 0x4 - core index']
  #allocation1 [shape = 'u32[144,128]{1,0:T(1,128)}', space=vmem, size = 0x12000, scoped, tag = 'internal scratch']
  %s0 = inlined_call_operand.hbm [shape: f32[8,128], index: 0, kind: input, shape index: {}]
  %s1 = inlined_call_operand.hbm [shape: f32[8,128], index: 1, kind: input, shape index: {}]
  %s2 = inlined_call_operand.hbm [shape: f32[128,128], index: 2, kind: input, shape index: {}]
  %s3 = inlined_call_operand.vmem [shape: f32[1,128], index: 3, kind: input, shape index: {}]
  %s4 = inlined_call_operand.hbm [shape: f32[128,128], index: 4, kind: input, shape index: {}]
  %s5 = inlined_call_operand.hbm [shape: f32[128,128], index: 5, kind: input, shape index: {}]
  %s6 = inlined_call_operand.vmem [shape: f32[1,128], index: 6, kind: input, shape index: {}]
  %s7 = inlined_call_operand.hbm [shape: f32[128,128], index: 7, kind: input, shape index: {}]
  %s8 = inlined_call_operand.hbm [shape: f32[128,128], index: 8, kind: input, shape index: {}]
  %s9 = inlined_call_operand.vmem [shape: f32[1,128], index: 9, kind: input, shape index: {}]
  %s10 = inlined_call_operand.hbm [shape: f32[8,128], index: 10, kind: output, shape index: {}]
  %s11 = sld [smem:[#allocation0]]
  $region78: #{tpu_custom_call.1} parent=0
    _
  %s13 = ssub.s32 1, %s11
  %s14 = scalar_select 0, %s13, %s11
  $region1: #{tpu_custom_call.1} parent=0
    #allocation2 [shape = 'u8[4096]{0}', space=vmem, size = 0x1000, scoped, tag = 'input window, operand 0, single buffered']
    #allocation3 [shape = 's32[1]{0}', space=sflag, size = 0x4, scoped, tag = 'scoped memory for tpu_custom_call.1']
    #allocation4 [shape = 's32[1]{0}', space=sflag, size = 0x4, scoped, tag = 'scoped memory for tpu_custom_call.1']
    #allocation5 [shape = 'u8[4096]{0}', space=vmem, size = 0x1000, scoped, tag = 'input window, operand 1, single buffered']
    #allocation6 [shape = 's32[1]{0}', space=sflag, size = 0x4, scoped, tag = 'scoped memory for tpu_custom_call.1']
    #allocation7 [shape = 'u8[65536]{0}', space=vmem, size = 0x10000, scoped, tag = 'input window, operand 2, single buffered']
    #allocation8 [shape = 'u8[65536]{0}', space=vmem, size = 0x10000, scoped, tag = 'input window, operand 4, single buffered']
    #allocation9 [shape = 's32[1]{0}', space=sflag, size = 0x4, scoped, tag = 'scoped memory for tpu_custom_call.1']
    #allocation10 [shape = 'u8[65536]{0}', space=vmem, size = 0x10000, scoped, tag = 'input window, operand 5, single buffered']
    #allocation11 [shape = 'u8[65536]{0}', space=vmem, size = 0x10000, scoped, tag = 'input window, operand 7, single buffered']
    #allocation12 [shape = 's32[1]{0}', space=sflag, size = 0x4, scoped, tag = 'scoped memory for tpu_custom_call.1']
    #allocation13 [shape = 'u8[65536]{0}', space=vmem, size = 0x10000, scoped, tag = 'input window, operand 8, single buffered']
    #allocation14 [shape = 'u8[4096]{0}', space=vmem, size = 0x1000, scoped, tag = 'output window, operand 0, single buffered']
    %15 = vsyncpa [#allocation3], 0
    %16 = vsyncpa [#allocation6], 0
    %17 = vsyncpa [#allocation9], 0
    %18 = vsyncpa [#allocation12], 0
    %19 = vsyncpa [#allocation4], 0
    // Predicated region
    $region2: #{tpu_custom_call.1} parent=1 // pred_check
      _
    $region3: #{tpu_custom_call.1} parent=1 // pred_check_branch
      %21 = sbr.rel (0) target = $region5
    $region4: #{tpu_custom_call.1} parent=1 // pred_region
      %s23 = ssub.s32 128, 128
      %24 = vsyncadd [#allocation3], %s23
      %s26 = sshll.u32 [#allocation2], 4
      %s27 = int_to_ptr.vmem [resolvable:$true] %s26
      %29 = dma.hbm_to_vmem [thread:$0]  %s0, 128, %s27, [#allocation3]
    $region5: #{tpu_custom_call.1} parent=1 // pred_fallthru
      _
    // Predicated region
    $region6: #{tpu_custom_call.1} parent=1 // pred_check
      _
    $region7: #{tpu_custom_call.1} parent=1 // pred_check_branch
      %31 = sbr.rel (0) target = $region9
    $region8: #{tpu_custom_call.1} parent=1 // pred_region
      %s33 = ssub.s32 128, 128
      %34 = vsyncadd [#allocation6], %s33
      %s36 = sshll.u32 [#allocation5], 4
      %s37 = int_to_ptr.vmem [resolvable:$true] %s36
      %39 = dma.hbm_to_vmem [thread:$0]  %s1, 128, %s37, [#allocation6]
    $region9: #{tpu_custom_call.1} parent=1 // pred_fallthru
      _
    // Predicated region
    $region10: #{tpu_custom_call.1} parent=1 // pred_check
      _
    $region11: #{tpu_custom_call.1} parent=1 // pred_check_branch
      %41 = sbr.rel (0) target = $region13
    $region12: #{tpu_custom_call.1} parent=1 // pred_region
      %s43 = ssub.s32 2048, 2048
      %44 = vsyncadd [#allocation6], %s43
      %s45 = sshll.u32 [#allocation7], 4
      %s46 = int_to_ptr.vmem [resolvable:$true] %s45
      %51 = dma.hbm_to_vmem [thread:$0]  %s2, 2048, %s46, [#allocation6], 128, 128, 8
    $region13: #{tpu_custom_call.1} parent=1 // pred_fallthru
      _
    // Predicated region
    $region14: #{tpu_custom_call.1} parent=1 // pred_check
      _
    $region15: #{tpu_custom_call.1} parent=1 // pred_check_branch
      %53 = sbr.rel (0) target = $region17
    $region16: #{tpu_custom_call.1} parent=1 // pred_region
      _
    $region17: #{tpu_custom_call.1} parent=1 // pred_fallthru
      _
    // Predicated region
    $region18: #{tpu_custom_call.1} parent=1 // pred_check
      _
    $region19: #{tpu_custom_call.1} parent=1 // pred_check_branch
      %55 = sbr.rel (0) target = $region21
    $region20: #{tpu_custom_call.1} parent=1 // pred_region
      %s57 = ssub.s32 2048, 2048
      %58 = vsyncadd [#allocation9], %s57
      %s59 = sshll.u32 [#allocation8], 4
      %s60 = int_to_ptr.vmem [resolvable:$true] %s59
      %65 = dma.hbm_to_vmem [thread:$0]  %s4, 2048, %s60, [#allocation9], 128, 128, 8
    $region21: #{tpu_custom_call.1} parent=1 // pred_fallthru
      _
    // Predicated region
    $region22: #{tpu_custom_call.1} parent=1 // pred_check
      _
    $region23: #{tpu_custom_call.1} parent=1 // pred_check_branch
      %67 = sbr.rel (0) target = $region25
    $region24: #{tpu_custom_call.1} parent=1 // pred_region
      %s69 = ssub.s32 2048, 2048
      %70 = vsyncadd [#allocation9], %s69
      %s71 = sshll.u32 [#allocation10], 4
      %s72 = int_to_ptr.vmem [resolvable:$true] %s71
      %77 = dma.hbm_to_vmem [thread:$0]  %s5, 2048, %s72, [#allocation9], 128, 128, 8
    $region25: #{tpu_custom_call.1} parent=1 // pred_fallthru
      _
    // Predicated region
    $region26: #{tpu_custom_call.1} parent=1 // pred_check
      _
    $region27: #{tpu_custom_call.1} parent=1 // pred_check_branch
      %79 = sbr.rel (0) target = $region29
    $region28: #{tpu_custom_call.1} parent=1 // pred_region
      _
    $region29: #{tpu_custom_call.1} parent=1 // pred_fallthru
      _
    // Predicated region
    $region30: #{tpu_custom_call.1} parent=1 // pred_check
      _
    $region31: #{tpu_custom_call.1} parent=1 // pred_check_branch
      %81 = sbr.rel (0) target = $region33
    $region32: #{tpu_custom_call.1} parent=1 // pred_region
      %s83 = ssub.s32 2048, 2048
      %84 = vsyncadd [#allocation12], %s83
      %s85 = sshll.u32 [#allocation11], 4
      %s86 = int_to_ptr.vmem [resolvable:$true] %s85
      %91 = dma.hbm_to_vmem [thread:$0]  %s7, 2048, %s86, [#allocation12], 128, 128, 8
    $region33: #{tpu_custom_call.1} parent=1 // pred_fallthru
      _
    // Predicated region
    $region34: #{tpu_custom_call.1} parent=1 // pred_check
      _
    $region35: #{tpu_custom_call.1} parent=1 // pred_check_branch
      %93 = sbr.rel (0) target = $region37
    $region36: #{tpu_custom_call.1} parent=1 // pred_region
      %s95 = ssub.s32 2048, 2048
      %96 = vsyncadd [#allocation12], %s95
      %s97 = sshll.u32 [#allocation13], 4
      %s98 = int_to_ptr.vmem [resolvable:$true] %s97
      %103 = dma.hbm_to_vmem [thread:$0]  %s8, 2048, %s98, [#allocation12], 128, 128, 8
    $region37: #{tpu_custom_call.1} parent=1 // pred_fallthru
      _
    // Predicated region
    $region38: #{tpu_custom_call.1} parent=1 // pred_check
      _
    $region39: #{tpu_custom_call.1} parent=1 // pred_check_branch
      %105 = sbr.rel (0) target = $region41
    $region40: #{tpu_custom_call.1} parent=1 // pred_region
      _
    $region41: #{tpu_custom_call.1} parent=1 // pred_fallthru
      _
    // Predicated region
    $region42: #{tpu_custom_call.1} parent=1 // pred_check
      _
    $region43: #{tpu_custom_call.1} parent=1 // pred_check_branch
      %107 = sbr.rel (0) target = $region45
    $region44: #{tpu_custom_call.1} parent=1 // pred_region
      %108 = dma.done [#allocation3], 128
    $region45: #{tpu_custom_call.1} parent=1 // pred_fallthru
      _
    // Predicated region
    $region46: #{tpu_custom_call.1} parent=1 // pred_check
      _
    $region47: #{tpu_custom_call.1} parent=1 // pred_check_branch
      %110 = sbr.rel (0) target = $region49
    $region48: #{tpu_custom_call.1} parent=1 // pred_region
      %111 = dma.done [#allocation6], 128
    $region49: #{tpu_custom_call.1} parent=1 // pred_fallthru
      _
    // Predicated region
    $region50: #{tpu_custom_call.1} parent=1 // pred_check
      _
    $region51: #{tpu_custom_call.1} parent=1 // pred_check_branch
      %113 = sbr.rel (0) target = $region53
    $region52: #{tpu_custom_call.1} parent=1 // pred_region
      %114 = dma.done [#allocation6], 2048
    $region53: #{tpu_custom_call.1} parent=1 // pred_fallthru
      _
    // Predicated region
    $region54: #{tpu_custom_call.1} parent=1 // pred_check
      _
    $region55: #{tpu_custom_call.1} parent=1 // pred_check_branch
      %116 = sbr.rel (0) target = $region57
    $region56: #{tpu_custom_call.1} parent=1 // pred_region
      %117 = dma.done [#allocation9], 2048
    $region57: #{tpu_custom_call.1} parent=1 // pred_fallthru
      _
    // Predicated region
    $region58: #{tpu_custom_call.1} parent=1 // pred_check
      _
    $region59: #{tpu_custom_call.1} parent=1 // pred_check_branch
      %119 = sbr.rel (0) target = $region61
    $region60: #{tpu_custom_call.1} parent=1 // pred_region
      %120 = dma.done [#allocation9], 2048
    $region61: #{tpu_custom_call.1} parent=1 // pred_fallthru
      _
    // Predicated region
    $region62: #{tpu_custom_call.1} parent=1 // pred_check
      _
    $region63: #{tpu_custom_call.1} parent=1 // pred_check_branch
      %122 = sbr.rel (0) target = $region65
    $region64: #{tpu_custom_call.1} parent=1 // pred_region
      %123 = dma.done [#allocation12], 2048
    $region65: #{tpu_custom_call.1} parent=1 // pred_fallthru
      _
    // Predicated region
    $region66: #{tpu_custom_call.1} parent=1 // pred_check
      _
    $region67: #{tpu_custom_call.1} parent=1 // pred_check_branch
      %125 = sbr.rel (0) target = $region69
    $region68: #{tpu_custom_call.1} parent=1 // pred_region
      %126 = dma.done [#allocation12], 2048
    $region69: #{tpu_custom_call.1} parent=1 // pred_fallthru
      _
    %v127 = vld [vmem:[#allocation2] sm:$0xff]
    %v128 = vld [vmem:[#allocation5] sm:$0xff]
    %v129 = vld [vmem:[#allocation7] sm:$0xff]
    %v130 = vld [vmem:[#allocation7 + $0x8] sm:$0xff]
    %v131 = vld [vmem:[#allocation7 + $0x10] sm:$0xff]
    %v132 = vld [vmem:[#allocation7 + $0x18] sm:$0xff]
    %v133 = vld [vmem:[#allocation7 + $0x20] sm:$0xff]
    %v134 = vld [vmem:[#allocation7 + $0x28] sm:$0xff]
    %v135 = vld [vmem:[#allocation7 + $0x30] sm:$0xff]
    %v136 = vld [vmem:[#allocation7 + $0x38] sm:$0xff]
    %v137 = vld [vmem:[#allocation7 + $0x40] sm:$0xff]
    %v138 = vld [vmem:[#allocation7 + $0x48] sm:$0xff]
    %v139 = vld [vmem:[#allocation7 + $0x50] sm:$0xff]
    %v140 = vld [vmem:[#allocation7 + $0x58] sm:$0xff]
    %v141 = vld [vmem:[#allocation7 + $0x60] sm:$0xff]
    %v142 = vld [vmem:[#allocation7 + $0x68] sm:$0xff]
    %v143 = vld [vmem:[#allocation7 + $0x70] sm:$0xff]
    %v144 = vld [vmem:[#allocation7 + $0x78] sm:$0xff]
    %v145 = vld [vmem:[%s3] sm:$0x1]
    %v147 = vlaneseq
    %v148 = vshrl.u32 %v147, 7
    %v149 = vsub.s32 0, %v148
    %v150 = vrot.slane %v145, %v149
    %152 = vmatprep.subr.mxu0 0.0
    %153 = vmatpush1.msra.mxu0 %v144
    %154 = vmatprep.subr.mxu0 0.0
    %155 = vmatpush1.msra.mxu0 %v143
    %156 = vmatprep.subr.mxu0 0.0
    %157 = vmatpush1.msra.mxu0 %v142
    %158 = vmatprep.subr.mxu0 0.0
    %159 = vmatpush1.msra.mxu0 %v141
    %160 = vmatprep.subr.mxu0 0.0
    %161 = vmatpush1.msra.mxu0 %v140
    %162 = vmatprep.subr.mxu0 0.0
    %163 = vmatpush1.msra.mxu0 %v139
    %164 = vmatprep.subr.mxu0 0.0
    %165 = vmatpush1.msra.mxu0 %v138
    %166 = vmatprep.subr.mxu0 0.0
    %167 = vmatpush1.msra.mxu0 %v137
    %168 = vmatprep.subr.mxu0 0.0
    %169 = vmatpush1.msra.mxu0 %v136
    %170 = vmatprep.subr.mxu0 0.0
    %171 = vmatpush1.msra.mxu0 %v135
    %172 = vmatprep.subr.mxu0 0.0
    %173 = vmatpush1.msra.mxu0 %v134
    %174 = vmatprep.subr.mxu0 0.0
    %175 = vmatpush1.msra.mxu0 %v133
    %176 = vmatprep.subr.mxu0 0.0
    %177 = vmatpush1.msra.mxu0 %v132
    %178 = vmatprep.subr.mxu0 0.0
    %179 = vmatpush1.msra.mxu0 %v131
    %180 = vmatprep.subr.mxu0 0.0
    %181 = vmatpush1.msra.mxu0 %v130
    %182 = vmatprep.subr.mxu0 0.0
    %183 = vmatpush1.msra.mxu0 %v129
    %184 = vmatprep.subr.mxu0 0.0
    %185 = vmatpush2.msra.mxu0 0.0
    %186 = vmatprep.subr.mxu0 0.0
    %187 = vmatpush2.msra.mxu0 0.0
    %188 = vmatprep.subr.mxu0 0.0
    %189 = vmatpush2.msra.mxu0 0.0
    %190 = vmatprep.subr.mxu0 0.0
    %191 = vmatpush2.msra.mxu0 0.0
    %192 = vmatprep.subr.mxu0 0.0
    %193 = vmatpush2.msra.mxu0 0.0
    %194 = vmatprep.subr.mxu0 0.0
    %195 = vmatpush2.msra.mxu0 0.0
    %196 = vmatprep.subr.mxu0 0.0
    %197 = vmatpush2.msra.mxu0 0.0
    %198 = vmatprep.subr.mxu0 0.0
    %199 = vmatpush2.msra.mxu0 0.0
    %200 = vmatprep.subr.mxu0 0.0
    %201 = vmatpush2.msra.mxu0 0.0
    %202 = vmatprep.subr.mxu0 0.0
    %203 = vmatpush2.msra.mxu0 0.0
    %204 = vmatprep.subr.mxu0 0.0
    %205 = vmatpush2.msra.mxu0 0.0
    %206 = vmatprep.subr.mxu0 0.0
    %207 = vmatpush2.msra.mxu0 0.0
    %208 = vmatprep.subr.mxu0 0.0
    %209 = vmatpush2.msra.mxu0 0.0
    %210 = vmatprep.subr.mxu0 0.0
    %211 = vmatpush2.msra.mxu0 0.0
    %212 = vmatprep.subr.mxu0 0.0
    %213 = vmatpush2.msra.mxu0 0.0
    %214 = vmatprep.subr.mxu0 0.0
    %215 = vmatpush2.msra.mxu0 0.0
    %216 = vmatprep.mubr.f32.mxu0 0.0
    %217 = vmatmul.mubr.f32.gmra.mxu0 %v127
    %v218 = vpop.f32.mrf.mxu0
    %v219 = vadd.f32 %v150, %v218
    %v220 = vpop.f32.mrf.mxu0
    %221 = vdwg.mxu0
    %v222 = vmax.f32 %v219, 0.0
    %v223 = vld [vmem:[#allocation8] sm:$0xff]
    %v224 = vld [vmem:[#allocation8 + $0x8] sm:$0xff]
    %v225 = vld [vmem:[#allocation8 + $0x10] sm:$0xff]
    %v226 = vld [vmem:[#allocation8 + $0x18] sm:$0xff]
    %v227 = vld [vmem:[#allocation8 + $0x20] sm:$0xff]
    %v228 = vld [vmem:[#allocation8 + $0x28] sm:$0xff]
    %v229 = vld [vmem:[#allocation8 + $0x30] sm:$0xff]
    %v230 = vld [vmem:[#allocation8 + $0x38] sm:$0xff]
    %v231 = vld [vmem:[#allocation8 + $0x40] sm:$0xff]
    %v232 = vld [vmem:[#allocation8 + $0x48] sm:$0xff]
    %v233 = vld [vmem:[#allocation8 + $0x50] sm:$0xff]
    %v234 = vld [vmem:[#allocation8 + $0x58] sm:$0xff]
    %v235 = vld [vmem:[#allocation8 + $0x60] sm:$0xff]
    %v236 = vld [vmem:[#allocation8 + $0x68] sm:$0xff]
    %v237 = vld [vmem:[#allocation8 + $0x70] sm:$0xff]
    %v238 = vld [vmem:[#allocation8 + $0x78] sm:$0xff]
    %v239 = vld [vmem:[#allocation10] sm:$0xff]
    %v240 = vld [vmem:[#allocation10 + $0x8] sm:$0xff]
    %v241 = vld [vmem:[#allocation10 + $0x10] sm:$0xff]
    %v242 = vld [vmem:[#allocation10 + $0x18] sm:$0xff]
    %v243 = vld [vmem:[#allocation10 + $0x20] sm:$0xff]
    %v244 = vld [vmem:[#allocation10 + $0x28] sm:$0xff]
    %v245 = vld [vmem:[#allocation10 + $0x30] sm:$0xff]
    %v246 = vld [vmem:[#allocation10 + $0x38] sm:$0xff]
    %v247 = vld [vmem:[#allocation10 + $0x40] sm:$0xff]
    %v248 = vld [vmem:[#allocation10 + $0x48] sm:$0xff]
    %v249 = vld [vmem:[#allocation10 + $0x50] sm:$0xff]
    %v250 = vld [vmem:[#allocation10 + $0x58] sm:$0xff]
    %v251 = vld [vmem:[#allocation10 + $0x60] sm:$0xff]
    %v252 = vld [vmem:[#allocation10 + $0x68] sm:$0xff]
    %v253 = vld [vmem:[#allocation10 + $0x70] sm:$0xff]
    %v254 = vld [vmem:[#allocation10 + $0x78] sm:$0xff]
    %v255 = vld [vmem:[%s6] sm:$0x1]
    %256 = vmatprep.subr.mxu0 0.0
    %257 = vmatpush1.msra.mxu0 %v254
    %258 = vmatprep.subr.mxu0 0.0
    %259 = vmatpush1.msra.mxu0 %v253
    %260 = vmatprep.subr.mxu0 0.0
    %261 = vmatpush1.msra.mxu0 %v252
    %262 = vmatprep.subr.mxu0 0.0
    %263 = vmatpush1.msra.mxu0 %v251
    %264 = vmatprep.subr.mxu0 0.0
    %265 = vmatpush1.msra.mxu0 %v250
    %266 = vmatprep.subr.mxu0 0.0
    %267 = vmatpush1.msra.mxu0 %v249
    %268 = vmatprep.subr.mxu0 0.0
    %269 = vmatpush1.msra.mxu0 %v248
    %270 = vmatprep.subr.mxu0 0.0
    %271 = vmatpush1.msra.mxu0 %v247
    %272 = vmatprep.subr.mxu0 0.0
    %273 = vmatpush1.msra.mxu0 %v246
    %274 = vmatprep.subr.mxu0 0.0
    %275 = vmatpush1.msra.mxu0 %v245
    %276 = vmatprep.subr.mxu0 0.0
    %277 = vmatpush1.msra.mxu0 %v244
    %278 = vmatprep.subr.mxu0 0.0
    %279 = vmatpush1.msra.mxu0 %v243
    %280 = vmatprep.subr.mxu0 0.0
    %281 = vmatpush1.msra.mxu0 %v242
    %282 = vmatprep.subr.mxu0 0.0
    %283 = vmatpush1.msra.mxu0 %v241
    %284 = vmatprep.subr.mxu0 0.0
    %285 = vmatpush1.msra.mxu0 %v240
    %286 = vmatprep.subr.mxu0 0.0
    %287 = vmatpush1.msra.mxu0 %v239
    %288 = vmatprep.subr.mxu0 0.0
    %289 = vmatpush2.msra.mxu0 0.0
    %290 = vmatprep.subr.mxu0 0.0
    %291 = vmatpush2.msra.mxu0 0.0
    %292 = vmatprep.subr.mxu0 0.0
    %293 = vmatpush2.msra.mxu0 0.0
    %294 = vmatprep.subr.mxu0 0.0
    %295 = vmatpush2.msra.mxu0 0.0
    %296 = vmatprep.subr.mxu0 0.0
    %297 = vmatpush2.msra.mxu0 0.0
    %298 = vmatprep.subr.mxu0 0.0
    %299 = vmatpush2.msra.mxu0 0.0
    %300 = vmatprep.subr.mxu0 0.0
    %301 = vmatpush2.msra.mxu0 0.0
    %302 = vmatprep.subr.mxu0 0.0
    %303 = vmatpush2.msra.mxu0 0.0
    %304 = vmatprep.subr.mxu0 0.0
    %305 = vmatpush2.msra.mxu0 0.0
    %306 = vmatprep.subr.mxu0 0.0
    %307 = vmatpush2.msra.mxu0 0.0
    %308 = vmatprep.subr.mxu0 0.0
    %309 = vmatpush2.msra.mxu0 0.0
    %310 = vmatprep.subr.mxu0 0.0
    %311 = vmatpush2.msra.mxu0 0.0
    %312 = vmatprep.subr.mxu0 0.0
    %313 = vmatpush2.msra.mxu0 0.0
    %314 = vmatprep.subr.mxu0 0.0
    %315 = vmatpush2.msra.mxu0 0.0
    %316 = vmatprep.subr.mxu0 0.0
    %317 = vmatpush2.msra.mxu0 0.0
    %318 = vmatprep.subr.mxu0 0.0
    %319 = vmatpush2.msra.mxu0 0.0
    %320 = vmatprep.mubr.f32.mxu0 0.0
    %321 = vmatmul.mubr.f32.gmra.mxu0 %v128
    %v322 = vpop.f32.mrf.mxu0
    %v323 = vadd.f32 0.0, %v322
    %v324 = vpop.f32.mrf.mxu0
    %325 = vdwg.mxu0
    %326 = vmatprep.subr.mxu0 0.0
    %327 = vmatpush1.msra.mxu0 %v238
    %328 = vmatprep.subr.mxu0 0.0
    %329 = vmatpush1.msra.mxu0 %v237
    %330 = vmatprep.subr.mxu0 0.0
    %331 = vmatpush1.msra.mxu0 %v236
    %332 = vmatprep.subr.mxu0 0.0
    %333 = vmatpush1.msra.mxu0 %v235
    %334 = vmatprep.subr.mxu0 0.0
    %335 = vmatpush1.msra.mxu0 %v234
    %336 = vmatprep.subr.mxu0 0.0
    %337 = vmatpush1.msra.mxu0 %v233
    %338 = vmatprep.subr.mxu0 0.0
    %339 = vmatpush1.msra.mxu0 %v232
    %340 = vmatprep.subr.mxu0 0.0
    %341 = vmatpush1.msra.mxu0 %v231
    %342 = vmatprep.subr.mxu0 0.0
    %343 = vmatpush1.msra.mxu0 %v230
    %344 = vmatprep.subr.mxu0 0.0
    %345 = vmatpush1.msra.mxu0 %v229
    %346 = vmatprep.subr.mxu0 0.0
    %347 = vmatpush1.msra.mxu0 %v228
    %348 = vmatprep.subr.mxu0 0.0
    %349 = vmatpush1.msra.mxu0 %v227
    %350 = vmatprep.subr.mxu0 0.0
    %351 = vmatpush1.msra.mxu0 %v226
    %352 = vmatprep.subr.mxu0 0.0
    %353 = vmatpush1.msra.mxu0 %v225
    %354 = vmatprep.subr.mxu0 0.0
    %355 = vmatpush1.msra.mxu0 %v224
    %356 = vmatprep.subr.mxu0 0.0
    %357 = vmatpush1.msra.mxu0 %v223
    %358 = vmatprep.subr.mxu0 0.0
    %359 = vmatpush2.msra.mxu0 0.0
    %360 = vmatprep.subr.mxu0 0.0
    %361 = vmatpush2.msra.mxu0 0.0
    %362 = vmatprep.subr.mxu0 0.0
    %363 = vmatpush2.msra.mxu0 0.0
    %364 = vmatprep.subr.mxu0 0.0
    %365 = vmatpush2.msra.mxu0 0.0
    %366 = vmatprep.subr.mxu0 0.0
    %367 = vmatpush2.msra.mxu0 0.0
    %368 = vmatprep.subr.mxu0 0.0
    %369 = vmatpush2.msra.mxu0 0.0
    %370 = vmatprep.subr.mxu0 0.0
    %371 = vmatpush2.msra.mxu0 0.0
    %372 = vmatprep.subr.mxu0 0.0
    %373 = vmatpush2.msra.mxu0 0.0
    %374 = vmatprep.subr.mxu0 0.0
    %375 = vmatpush2.msra.mxu0 0.0
    %376 = vmatprep.subr.mxu0 0.0
    %377 = vmatpush2.msra.mxu0 0.0
    %378 = vmatprep.subr.mxu0 0.0
    %379 = vmatpush2.msra.mxu0 0.0
    %380 = vmatprep.subr.mxu0 0.0
    %381 = vmatpush2.msra.mxu0 0.0
    %382 = vmatprep.subr.mxu0 0.0
    %383 = vmatpush2.msra.mxu0 0.0
    %384 = vmatprep.subr.mxu0 0.0
    %385 = vmatpush2.msra.mxu0 0.0
    %386 = vmatprep.subr.mxu0 0.0
    %387 = vmatpush2.msra.mxu0 0.0
    %388 = vmatprep.subr.mxu0 0.0
    %389 = vmatpush2.msra.mxu0 0.0
    %390 = vmatprep.mubr.f32.mxu0 0.0
    %391 = vmatmul.mubr.f32.gmra.mxu0 %v222
    %v392 = vpop.f32.mrf.mxu0
    %v393 = vadd.f32 %v323, %v392
    %v394 = vpop.f32.mrf.mxu0
    %395 = vdwg.mxu0
    %v397 = vlaneseq
    %v398 = vshrl.u32 %v397, 7
    %v399 = vsub.s32 0, %v398
    %v400 = vrot.slane %v255, %v399
    %v402 = vadd.f32 %v393, %v400
    %v403 = vmax.f32 %v402, 0.0
    %v404 = vld [vmem:[#allocation11] sm:$0xff]
    %v405 = vld [vmem:[#allocation11 + $0x8] sm:$0xff]
    %v406 = vld [vmem:[#allocation11 + $0x10] sm:$0xff]
    %v407 = vld [vmem:[#allocation11 + $0x18] sm:$0xff]
    %v408 = vld [vmem:[#allocation11 + $0x20] sm:$0xff]
    %v409 = vld [vmem:[#allocation11 + $0x28] sm:$0xff]
    %v410 = vld [vmem:[#allocation11 + $0x30] sm:$0xff]
    %v411 = vld [vmem:[#allocation11 + $0x38] sm:$0xff]
    %v412 = vld [vmem:[#allocation11 + $0x40] sm:$0xff]
    %v413 = vld [vmem:[#allocation11 + $0x48] sm:$0xff]
    %v414 = vld [vmem:[#allocation11 + $0x50] sm:$0xff]
    %v415 = vld [vmem:[#allocation11 + $0x58] sm:$0xff]
    %v416 = vld [vmem:[#allocation11 + $0x60] sm:$0xff]
    %v417 = vld [vmem:[#allocation11 + $0x68] sm:$0xff]
    %v418 = vld [vmem:[#allocation11 + $0x70] sm:$0xff]
    %v419 = vld [vmem:[#allocation11 + $0x78] sm:$0xff]
    %v420 = vld [vmem:[#allocation13] sm:$0xff]
    %v421 = vld [vmem:[#allocation13 + $0x8] sm:$0xff]
    %v422 = vld [vmem:[#allocation13 + $0x10] sm:$0xff]
    %v423 = vld [vmem:[#allocation13 + $0x18] sm:$0xff]
    %v424 = vld [vmem:[#allocation13 + $0x20] sm:$0xff]
    %v425 = vld [vmem:[#allocation13 + $0x28] sm:$0xff]
    %v426 = vld [vmem:[#allocation13 + $0x30] sm:$0xff]
    %v427 = vld [vmem:[#allocation13 + $0x38] sm:$0xff]
    %v428 = vld [vmem:[#allocation13 + $0x40] sm:$0xff]
    %v429 = vld [vmem:[#allocation13 + $0x48] sm:$0xff]
    %v430 = vld [vmem:[#allocation13 + $0x50] sm:$0xff]
    %v431 = vld [vmem:[#allocation13 + $0x58] sm:$0xff]
    %v432 = vld [vmem:[#allocation13 + $0x60] sm:$0xff]
    %v433 = vld [vmem:[#allocation13 + $0x68] sm:$0xff]
    %v434 = vld [vmem:[#allocation13 + $0x70] sm:$0xff]
    %v435 = vld [vmem:[#allocation13 + $0x78] sm:$0xff]
    %v436 = vld [vmem:[%s9] sm:$0x1]
    %437 = vmatprep.subr.mxu0 0.0
    %438 = vmatpush1.msra.mxu0 %v435
    %439 = vmatprep.subr.mxu0 0.0
    %440 = vmatpush1.msra.mxu0 %v434
    %441 = vmatprep.subr.mxu0 0.0
    %442 = vmatpush1.msra.mxu0 %v433
    %443 = vmatprep.subr.mxu0 0.0
    %444 = vmatpush1.msra.mxu0 %v432
    %445 = vmatprep.subr.mxu0 0.0
    %446 = vmatpush1.msra.mxu0 %v431
    %447 = vmatprep.subr.mxu0 0.0
    %448 = vmatpush1.msra.mxu0 %v430
    %449 = vmatprep.subr.mxu0 0.0
    %450 = vmatpush1.msra.mxu0 %v429
    %451 = vmatprep.subr.mxu0 0.0
    %452 = vmatpush1.msra.mxu0 %v428
    %453 = vmatprep.subr.mxu0 0.0
    %454 = vmatpush1.msra.mxu0 %v427
    %455 = vmatprep.subr.mxu0 0.0
    %456 = vmatpush1.msra.mxu0 %v426
    %457 = vmatprep.subr.mxu0 0.0
    %458 = vmatpush1.msra.mxu0 %v425
    %459 = vmatprep.subr.mxu0 0.0
    %460 = vmatpush1.msra.mxu0 %v424
    %461 = vmatprep.subr.mxu0 0.0
    %462 = vmatpush1.msra.mxu0 %v423
    %463 = vmatprep.subr.mxu0 0.0
    %464 = vmatpush1.msra.mxu0 %v422
    %465 = vmatprep.subr.mxu0 0.0
    %466 = vmatpush1.msra.mxu0 %v421
    %467 = vmatprep.subr.mxu0 0.0
    %468 = vmatpush1.msra.mxu0 %v420
    %469 = vmatprep.subr.mxu0 0.0
    %470 = vmatpush2.msra.mxu0 0.0
    %471 = vmatprep.subr.mxu0 0.0
    %472 = vmatpush2.msra.mxu0 0.0
    %473 = vmatprep.subr.mxu0 0.0
    %474 = vmatpush2.msra.mxu0 0.0
    %475 = vmatprep.subr.mxu0 0.0
    %476 = vmatpush2.msra.mxu0 0.0
    %477 = vmatprep.subr.mxu0 0.0
    %478 = vmatpush2.msra.mxu0 0.0
    %479 = vmatprep.subr.mxu0 0.0
    %480 = vmatpush2.msra.mxu0 0.0
    %481 = vmatprep.subr.mxu0 0.0
    %482 = vmatpush2.msra.mxu0 0.0
    %483 = vmatprep.subr.mxu0 0.0
    %484 = vmatpush2.msra.mxu0 0.0
    %485 = vmatprep.subr.mxu0 0.0
    %486 = vmatpush2.msra.mxu0 0.0
    %487 = vmatprep.subr.mxu0 0.0
    %488 = vmatpush2.msra.mxu0 0.0
    %489 = vmatprep.subr.mxu0 0.0
    %490 = vmatpush2.msra.mxu0 0.0
    %491 = vmatprep.subr.mxu0 0.0
    %492 = vmatpush2.msra.mxu0 0.0
    %493 = vmatprep.subr.mxu0 0.0
    %494 = vmatpush2.msra.mxu0 0.0
    %495 = vmatprep.subr.mxu0 0.0
    %496 = vmatpush2.msra.mxu0 0.0
    %497 = vmatprep.subr.mxu0 0.0
    %498 = vmatpush2.msra.mxu0 0.0
    %499 = vmatprep.subr.mxu0 0.0
    %500 = vmatpush2.msra.mxu0 0.0
    %501 = vmatprep.mubr.f32.mxu0 0.0
    %502 = vmatmul.mubr.f32.gmra.mxu0 %v128
    %v503 = vpop.f32.mrf.mxu0
    %v504 = vadd.f32 0.0, %v503
    %v505 = vpop.f32.mrf.mxu0
    %506 = vdwg.mxu0
    %507 = vmatprep.subr.mxu0 0.0
    %508 = vmatpush1.msra.mxu0 %v419
    %509 = vmatprep.subr.mxu0 0.0
    %510 = vmatpush1.msra.mxu0 %v418
    %511 = vmatprep.subr.mxu0 0.0
    %512 = vmatpush1.msra.mxu0 %v417
    %513 = vmatprep.subr.mxu0 0.0
    %514 = vmatpush1.msra.mxu0 %v416
    %515 = vmatprep.subr.mxu0 0.0
    %516 = vmatpush1.msra.mxu0 %v415
    %517 = vmatprep.subr.mxu0 0.0
    %518 = vmatpush1.msra.mxu0 %v414
    %519 = vmatprep.subr.mxu0 0.0
    %520 = vmatpush1.msra.mxu0 %v413
    %521 = vmatprep.subr.mxu0 0.0
    %522 = vmatpush1.msra.mxu0 %v412
    %523 = vmatprep.subr.mxu0 0.0
    %524 = vmatpush1.msra.mxu0 %v411
    %525 = vmatprep.subr.mxu0 0.0
    %526 = vmatpush1.msra.mxu0 %v410
    %527 = vmatprep.subr.mxu0 0.0
    %528 = vmatpush1.msra.mxu0 %v409
    %529 = vmatprep.subr.mxu0 0.0
    %530 = vmatpush1.msra.mxu0 %v408
    %531 = vmatprep.subr.mxu0 0.0
    %532 = vmatpush1.msra.mxu0 %v407
    %533 = vmatprep.subr.mxu0 0.0
    %534 = vmatpush1.msra.mxu0 %v406
    %535 = vmatprep.subr.mxu0 0.0
    %536 = vmatpush1.msra.mxu0 %v405
    %537 = vmatprep.subr.mxu0 0.0
    %538 = vmatpush1.msra.mxu0 %v404
    %539 = vmatprep.subr.mxu0 0.0
    %540 = vmatpush2.msra.mxu0 0.0
    %541 = vmatprep.subr.mxu0 0.0
    %542 = vmatpush2.msra.mxu0 0.0
    %543 = vmatprep.subr.mxu0 0.0
    %544 = vmatpush2.msra.mxu0 0.0
    %545 = vmatprep.subr.mxu0 0.0
    %546 = vmatpush2.msra.mxu0 0.0
    %547 = vmatprep.subr.mxu0 0.0
    %548 = vmatpush2.msra.mxu0 0.0
    %549 = vmatprep.subr.mxu0 0.0
    %550 = vmatpush2.msra.mxu0 0.0
    %551 = vmatprep.subr.mxu0 0.0
    %552 = vmatpush2.msra.mxu0 0.0
    %553 = vmatprep.subr.mxu0 0.0
    %554 = vmatpush2.msra.mxu0 0.0
    %555 = vmatprep.subr.mxu0 0.0
    %556 = vmatpush2.msra.mxu0 0.0
    %557 = vmatprep.subr.mxu0 0.0
    %558 = vmatpush2.msra.mxu0 0.0
    %559 = vmatprep.subr.mxu0 0.0
    %560 = vmatpush2.msra.mxu0 0.0
    %561 = vmatprep.subr.mxu0 0.0
    %562 = vmatpush2.msra.mxu0 0.0
    %563 = vmatprep.subr.mxu0 0.0
    %564 = vmatpush2.msra.mxu0 0.0
    %565 = vmatprep.subr.mxu0 0.0
    %566 = vmatpush2.msra.mxu0 0.0
    %567 = vmatprep.subr.mxu0 0.0
    %568 = vmatpush2.msra.mxu0 0.0
    %569 = vmatprep.subr.mxu0 0.0
    %570 = vmatpush2.msra.mxu0 0.0
    %571 = vmatprep.mubr.f32.mxu0 0.0
    %572 = vmatmul.mubr.f32.gmra.mxu0 %v403
    %v573 = vpop.f32.mrf.mxu0
    %v574 = vadd.f32 %v504, %v573
    %v575 = vpop.f32.mrf.mxu0
    %576 = vdwg.mxu0
    %v578 = vlaneseq
    %v579 = vshrl.u32 %v578, 7
    %v580 = vsub.s32 0, %v579
    %v581 = vrot.slane %v436, %v580
    %v583 = vadd.f32 %v574, %v581
    %584 = vst [vmem:[#allocation14] sm:$0xff] %v583
    // Predicated region
    $region70: #{tpu_custom_call.1} parent=1 // pred_check
      _
    $region71: #{tpu_custom_call.1} parent=1 // pred_check_branch
      %586 = sbr.rel (0) target = $region73
    $region72: #{tpu_custom_call.1} parent=1 // pred_region
      %s588 = ssub.s32 128, 128
      %589 = vsyncadd [#allocation4], %s588
      %s591 = sshll.u32 [#allocation14], 4
      %s592 = int_to_ptr.vmem [resolvable:$true] %s591
      %594 = dma.vmem_to_hbm [thread:$0]  %s592, 128, %s10, [#allocation4]
    $region73: #{tpu_custom_call.1} parent=1 // pred_fallthru
      _
    // Predicated region
    $region74: #{tpu_custom_call.1} parent=1 // pred_check
      _
    $region75: #{tpu_custom_call.1} parent=1 // pred_check_branch
      %596 = sbr.rel (0) target = $region77
    $region76: #{tpu_custom_call.1} parent=1 // pred_region
      %597 = dma.done [#allocation4], 128
    $region77: #{tpu_custom_call.1} parent=1 // pred_fallthru
      _
    %598 = vsyncpa [#allocation3], 1
    %599 = vsyncpa [#allocation6], 1
    %600 = vsyncpa [#allocation9], 1
    %601 = vsyncpa [#allocation12], 1
    %602 = vsyncpa [#allocation4], 1

</llo_original>
